<compile_context>
chip_gen: v5e
topology: v5e:2x2
jax: 0.10.0
libtpu: 0.0.40
codegen_flags: <defaults>
</compile_context>

<pallas_src>
import numpy as np

import jax
import jax.numpy as jnp
from jax import lax
from jax.experimental import pallas as pl
from jax.experimental.pallas import tpu as pltpu


# Tap enumeration order shared by the kernel and the stacked weights.
_TAPS = tuple((kh, kw) for kh in range(3) for kw in range(3))   # dh = kh-1, dw = kw-1


def _round_up(n, m):
    return ((n + m - 1) // m) * m


def _make_si_asb_kernel(H, W, Cin, Cout, kin, ts, Bt):
    """sigmoid(scale * conv3x3(x) + shift) for Bt images per grid step."""
    HW = H * W

    def kernel(x_ref, w_ref, m_ref, p_ref, o_ref):
        # ---- loop-invariant loads, hoisted out of the per-image loop ---------
        w = w_ref[...]                                    # (ts, 9*kin) f32
        scale = p_ref[0]                                  # (Cout, 1)   f32
        shift = p_ref[1]                                  # (Cout, 1)   f32
        row_m = {-1: m_ref[0:1, :], 1: m_ref[1:2, :]}     # row+dh in range
        col_m = {-1: m_ref[2:3, :], 1: m_ref[3:4, :]}     # col+dw in range
        tap_masks = []
        for kh, kw in _TAPS:
            dh, dw = kh - 1, kw - 1
            if dh == 0 and dw == 0:
                tap_masks.append(None)
            elif dh == 0:
                tap_masks.append(col_m[dw])
            elif dw == 0:
                tap_masks.append(row_m[dh])
            else:
                tap_masks.append(row_m[dh] * col_m[dw])   # corner taps
        zpad = (jnp.zeros((kin - Cin, HW), jnp.float32)
                if kin > Cin else None)                   # pad rows hit zero weight cols

        @pl.loop(0, Bt)
        def _(i):
            xf = x_ref[i].astype(jnp.float32)             # (Cin, HW), cast after load
            if zpad is not None:
                xf = jnp.concatenate([xf, zpad], axis=0)  # (kin, HW), 8-sublane aligned taps
            parts = []
            for t, (kh, kw) in enumerate(_TAPS):
                dh, dw = kh - 1, kw - 1
                s = dh * W + dw                           # flat spatial shift of this tap
                xt = xf if s == 0 else pltpu.roll(xf, (-s) % HW, 1)   # XLU lane rotation
                if tap_masks[t] is not None:
                    xt = xt * tap_masks[t]                # zero halo / wrapped lanes
                parts.append(xt)
            x_stk = jnp.concatenate(parts, axis=0)        # (9*kin, HW) K-stacked operand
            acc = jnp.dot(w, x_stk,
                          preferred_element_type=jnp.float32)   # (ts, HW), one MXU pass
            y = acc[:Cout, :] * scale + shift             # folded conv-bias + BN (eval)
            y = 0.5 * (jnp.tanh(0.5 * y) + 1.0)           # sigmoid via EUP tanh
            o_ref[i] = y.astype(o_ref.dtype)

    return kernel


def si_asb_pallas(x_nchw, w_oihw, bias, gamma, beta, mean, var, eps=1e-5):
    """siASB.forward: sigmoid(BatchNorm(Conv2d_3x3(x))) — fused Pallas kernel."""
    B, Cin, H, W = x_nchw.shape
    Cout = w_oihw.shape[0]
    HW = H * W
    ts = _round_up(max(Cout, 8), 8)     # sublane-aligned output rows of the dot
    kin = _round_up(max(Cin, 8), 8)     # sublane-aligned per-tap K rows
    out_dtype = x_nchw.dtype

    # Images per grid step: large enough to amortize per-step overhead and hit HBM
    # streaming efficiency, small enough for every chip's VMEM; keep >= 2 grid
    # steps when B >= 2 so both v7x TensorCores get work.
    Bt = min(B, 64)
    n_steps = pl.cdiv(B, Bt)
    if B >= 2 and n_steps < 2:
        n_steps = 2
    Bt = pl.cdiv(B, n_steps)            # balance images across steps
    n_steps = pl.cdiv(B, Bt)
    B_pad = n_steps * Bt

    # ---- parameter folding / packing (tiny, trace-time glue) -----------------
    scale = gamma / jnp.sqrt(var + eps)                   # BN eval-mode fold
    shift = (bias - mean) * scale + beta                  # conv bias folded in
    params = jnp.stack([scale, shift]).astype(jnp.float32).reshape(2, Cout, 1)

    # Weights K-stacked: W_stk[o, t*kin + ci] = w[o, ci, kh_t, kw_t], zero padded.
    w_taps = jnp.transpose(w_oihw, (2, 3, 0, 1)).reshape(9, Cout, Cin)
    w_taps = jnp.pad(w_taps, ((0, 0), (0, ts - Cout), (0, kin - Cin)))
    w_stk = jnp.transpose(w_taps, (1, 0, 2)).reshape(ts, 9 * kin).astype(jnp.float32)

    # Halo-validity edge masks (numpy at trace time):
    # rows = [row>=1, row<=H-2, col>=1, col<=W-2], each flattened to (HW,).
    rows, cols = np.indices((H, W))
    masks_np = np.stack([rows >= 1, rows <= H - 2,
                         cols >= 1, cols <= W - 2]).astype(np.float32).reshape(4, HW)
    masks = jnp.asarray(masks_np)

    # Keep the caller's dtype on the HBM path; contiguous (free) reshape to (B,C,HW).
    xp = x_nchw
    if B_pad > B:
        xp = jnp.pad(xp, ((0, B_pad - B), (0, 0), (0, 0), (0, 0)))
    x3 = xp.reshape(B_pad, Cin, HW)

    out = pl.pallas_call(
        _make_si_asb_kernel(H, W, Cin, Cout, kin, ts, Bt),
        out_shape=jax.ShapeDtypeStruct((B_pad, Cout, HW), out_dtype),
        grid=(n_steps,),
        in_specs=[
            pl.BlockSpec((Bt, Cin, HW), lambda b: (b, 0, 0)),    # activations
            pl.BlockSpec((ts, 9 * kin), lambda b: (0, 0)),       # K-stacked weights
            pl.BlockSpec((4, HW), lambda b: (0, 0)),             # edge masks
            pl.BlockSpec((2, Cout, 1), lambda b: (0, 0, 0)),     # BN scale/shift
        ],
        out_specs=pl.BlockSpec((Bt, Cout, HW), lambda b: (b, 0, 0)),
        compiler_params=pltpu.CompilerParams(
            dimension_semantics=("parallel",)),
    )(x3, w_stk, masks, params)

    return out.reshape(B_pad, Cout, H, W)[:B]


# ---- pure-JAX reference for verification -------------------------------------
def ref_si_asb(x_nchw, w_oihw, bias, gamma, beta, mean, var, eps=1e-5):
    y = lax.conv_general_dilated(
        x_nchw, w_oihw, window_strides=(1, 1), padding=((1, 1), (1, 1)),
        dimension_numbers=("NCHW", "OIHW", "NCHW"))
    y = y + bias[None, :, None, None]
    y = ((y - mean[None, :, None, None])
         / jnp.sqrt(var + eps)[None, :, None, None]
         * gamma[None, :, None, None]
         + beta[None, :, None, None])
    return jax.nn.sigmoid(y)


if __name__ == "__main__":
    B, C, H, W = 2, 4, 16, 16   # in_channels = out_channels = 4, kernel_size = 3

    key = jax.random.PRNGKey(0)
    kx, kw, kb, kg, kbe, km, kv = jax.random.split(key, 7)
    x = jax.random.normal(kx, (B, C, H, W), jnp.float32)
    w = jax.random.normal(kw, (C, C, 3, 3), jnp.float32) * 0.1
    b = jax.random.normal(kb, (C,), jnp.float32) * 0.1
    gamma = 1.0 + 0.1 * jax.random.normal(kg, (C,), jnp.float32)
    beta = 0.1 * jax.random.normal(kbe, (C,), jnp.float32)
    mean = 0.1 * jax.random.normal(km, (C,), jnp.float32)
    var = 1.0 + 0.1 * jax.random.uniform(kv, (C,), jnp.float32)

    out = jax.block_until_ready(si_asb_pallas(x, w, b, gamma, beta, mean, var))
    ref = jax.block_until_ready(ref_si_asb(x, w, b, gamma, beta, mean, var))

    assert out.shape == (B, C, H, W)
    err = float(jnp.max(jnp.abs(out - ref)))
    assert jnp.allclose(out, ref, atol=1e-4, rtol=1e-4), f"max abs err {err}"
    print("KERNEL_OK")
</pallas_src>

<mosaic_0001>
module attributes {stable_mosaic.version = 11 : i64} {
  func.func @kernel(%arg0: i32, %arg1: memref<1x4x256xf32, #tpu.memory_space<vmem>>, %arg2: memref<8x72xf32, #tpu.memory_space<vmem>>, %arg3: memref<4x256xf32, #tpu.memory_space<vmem>>, %arg4: memref<2x4x1xf32, #tpu.memory_space<vmem>>, %arg5: memref<1x4x256xf32, #tpu.memory_space<vmem>>) attributes {dimension_semantics = [#tpu.dimension_semantics<parallel>], iteration_bounds = array<i64: 2>, scalar_prefetch = 0 : i64, scratch_operands = 0 : i64, tpu.core_type = #tpu.core_type<tc>, window_params = [{transform_indices = @transform_0, window_bounds = array<i64: 1, 4, 256>}, {pipeline_mode = #tpu.pipeline_mode<synchronous>, transform_indices = @transform_1, window_bounds = array<i64: 8, 72>}, {pipeline_mode = #tpu.pipeline_mode<synchronous>, transform_indices = @transform_2, window_bounds = array<i64: 4, 256>}, {pipeline_mode = #tpu.pipeline_mode<synchronous>, transform_indices = @transform_3, window_bounds = array<i64: 2, 4, 1>}, {transform_indices = @transform_4, window_bounds = array<i64: 1, 4, 256>}]} {
    %c0 = arith.constant 0 : index
    %c0_0 = arith.constant 0 : index
    %0 = vector.load %arg2[%c0, %c0_0] : memref<8x72xf32, #tpu.memory_space<vmem>>, vector<8x72xf32>
    %c0_1 = arith.constant 0 : index
    %c0_2 = arith.constant 0 : index
    %c0_3 = arith.constant 0 : index
    %1 = vector.load %arg4[%c0_1, %c0_2, %c0_3] : memref<2x4x1xf32, #tpu.memory_space<vmem>>, vector<1x4x1xf32>
    %2 = vector.shape_cast %1 : vector<1x4x1xf32> to vector<4x1xf32>
    %c1 = arith.constant 1 : index
    %c0_4 = arith.constant 0 : index
    %c0_5 = arith.constant 0 : index
    %3 = vector.load %arg4[%c1, %c0_4, %c0_5] : memref<2x4x1xf32, #tpu.memory_space<vmem>>, vector<1x4x1xf32>
    %4 = vector.shape_cast %3 : vector<1x4x1xf32> to vector<4x1xf32>
    %c0_6 = arith.constant 0 : index
    %c0_7 = arith.constant 0 : index
    %5 = vector.load %arg3[%c0_6, %c0_7] : memref<4x256xf32, #tpu.memory_space<vmem>>, vector<1x256xf32>
    %c1_8 = arith.constant 1 : index
    %c0_9 = arith.constant 0 : index
    %6 = vector.load %arg3[%c1_8, %c0_9] : memref<4x256xf32, #tpu.memory_space<vmem>>, vector<1x256xf32>
    %c2 = arith.constant 2 : index
    %c0_10 = arith.constant 0 : index
    %7 = vector.load %arg3[%c2, %c0_10] : memref<4x256xf32, #tpu.memory_space<vmem>>, vector<1x256xf32>
    %c3 = arith.constant 3 : index
    %c0_11 = arith.constant 0 : index
    %8 = vector.load %arg3[%c3, %c0_11] : memref<4x256xf32, #tpu.memory_space<vmem>>, vector<1x256xf32>
    %9 = arith.mulf %5, %7 : vector<1x256xf32>
    %10 = arith.mulf %5, %8 : vector<1x256xf32>
    %11 = arith.mulf %6, %7 : vector<1x256xf32>
    %12 = arith.mulf %6, %8 : vector<1x256xf32>
    %cst = arith.constant 0.000000e+00 : f32
    %13 = vector.broadcast %cst : f32 to vector<4x256xf32>
    %c0_i32 = arith.constant 0 : i32
    %c1_i32 = arith.constant 1 : i32
    %14 = arith.muli %c0_i32, %c1_i32 : i32
    %c0_i32_12 = arith.constant 0 : i32
    %15 = arith.addi %c0_i32_12, %14 : i32
    %16 = arith.index_cast %15 : i32 to index
    %c0_13 = arith.constant 0 : index
    %c0_14 = arith.constant 0 : index
    %17 = vector.load %arg1[%16, %c0_13, %c0_14] : memref<1x4x256xf32, #tpu.memory_space<vmem>>, vector<1x4x256xf32>
    %18 = vector.shape_cast %17 : vector<1x4x256xf32> to vector<4x256xf32>
    %19 = tpu.concatenate %18, %13 in 0 : vector<4x256xf32>, vector<4x256xf32> -> vector<8x256xf32>
    %c17_i32 = arith.constant 17 : i32
    %20 = tpu.dynamic_rotate %19 by %c17_i32 dim 1 : vector<8x256xf32>, i32 -> vector<8x256xf32>
    %21 = vector.broadcast %9 : vector<1x256xf32> to vector<8x256xf32>
    %22 = arith.mulf %20, %21 : vector<8x256xf32>
    %c16_i32 = arith.constant 16 : i32
    %23 = tpu.dynamic_rotate %19 by %c16_i32 dim 1 : vector<8x256xf32>, i32 -> vector<8x256xf32>
    %24 = vector.broadcast %5 : vector<1x256xf32> to vector<8x256xf32>
    %25 = arith.mulf %23, %24 : vector<8x256xf32>
    %c15_i32 = arith.constant 15 : i32
    %26 = tpu.dynamic_rotate %19 by %c15_i32 dim 1 : vector<8x256xf32>, i32 -> vector<8x256xf32>
    %27 = vector.broadcast %10 : vector<1x256xf32> to vector<8x256xf32>
    %28 = arith.mulf %26, %27 : vector<8x256xf32>
    %c1_i32_15 = arith.constant 1 : i32
    %29 = tpu.dynamic_rotate %19 by %c1_i32_15 dim 1 : vector<8x256xf32>, i32 -> vector<8x256xf32>
    %30 = vector.broadcast %7 : vector<1x256xf32> to vector<8x256xf32>
    %31 = arith.mulf %29, %30 : vector<8x256xf32>
    %c255_i32 = arith.constant 255 : i32
    %32 = tpu.dynamic_rotate %19 by %c255_i32 dim 1 : vector<8x256xf32>, i32 -> vector<8x256xf32>
    %33 = vector.broadcast %8 : vector<1x256xf32> to vector<8x256xf32>
    %34 = arith.mulf %32, %33 : vector<8x256xf32>
    %c241_i32 = arith.constant 241 : i32
    %35 = tpu.dynamic_rotate %19 by %c241_i32 dim 1 : vector<8x256xf32>, i32 -> vector<8x256xf32>
    %36 = vector.broadcast %11 : vector<1x256xf32> to vector<8x256xf32>
    %37 = arith.mulf %35, %36 : vector<8x256xf32>
    %c240_i32 = arith.constant 240 : i32
    %38 = tpu.dynamic_rotate %19 by %c240_i32 dim 1 : vector<8x256xf32>, i32 -> vector<8x256xf32>
    %39 = vector.broadcast %6 : vector<1x256xf32> to vector<8x256xf32>
    %40 = arith.mulf %38, %39 : vector<8x256xf32>
    %c239_i32 = arith.constant 239 : i32
    %41 = tpu.dynamic_rotate %19 by %c239_i32 dim 1 : vector<8x256xf32>, i32 -> vector<8x256xf32>
    %42 = vector.broadcast %12 : vector<1x256xf32> to vector<8x256xf32>
    %43 = arith.mulf %41, %42 : vector<8x256xf32>
    %44 = tpu.concatenate %22, %25, %28, %31, %19, %34, %37, %40, %43 in 0 : vector<8x256xf32>, vector<8x256xf32>, vector<8x256xf32>, vector<8x256xf32>, vector<8x256xf32>, vector<8x256xf32>, vector<8x256xf32>, vector<8x256xf32>, vector<8x256xf32> -> vector<72x256xf32>
    %cst_16 = arith.constant dense<0.000000e+00> : vector<8x256xf32>
    %45 = tpu.matmul %0, %44, %cst_16 {dimension_numbers = #tpu.dot_dimension_numbers<[1], [0], [0], [1], [0, 0, 1, 1], [], []>} : vector<8x72xf32>, vector<72x256xf32>, vector<8x256xf32> -> vector<8x256xf32>
    %46 = vector.extract_strided_slice %45 {offsets = [0, 0], sizes = [4, 256], strides = [1, 1]} : vector<8x256xf32> to vector<4x256xf32>
    %47 = vector.broadcast %2 : vector<4x1xf32> to vector<4x256xf32>
    %48 = arith.mulf %46, %47 : vector<4x256xf32>
    %49 = vector.broadcast %4 : vector<4x1xf32> to vector<4x256xf32>
    %50 = arith.addf %48, %49 : vector<4x256xf32>
    %cst_17 = arith.constant 5.000000e-01 : f32
    %51 = vector.broadcast %cst_17 : f32 to vector<4x256xf32>
    %52 = arith.mulf %51, %50 : vector<4x256xf32>
    %53 = math.tanh %52 : vector<4x256xf32>
    %cst_18 = arith.constant 1.000000e+00 : f32
    %54 = vector.broadcast %cst_18 : f32 to vector<4x256xf32>
    %55 = arith.addf %53, %54 : vector<4x256xf32>
    %cst_19 = arith.constant 5.000000e-01 : f32
    %56 = vector.broadcast %cst_19 : f32 to vector<4x256xf32>
    %57 = arith.mulf %56, %55 : vector<4x256xf32>
    %58 = arith.index_cast %15 : i32 to index
    %c0_20 = arith.constant 0 : index
    %c0_21 = arith.constant 0 : index
    %59 = vector.load %arg5[%58, %c0_20, %c0_21] : memref<1x4x256xf32, #tpu.memory_space<vmem>>, vector<1x4x256xf32>
    %60 = vector.shape_cast %59 : vector<1x4x256xf32> to vector<4x256xf32>
    %61 = vector.shape_cast %57 : vector<4x256xf32> to vector<1x4x256xf32>
    tpu.vector_store %arg5[%58, %c0_20, %c0_21], %61 {strides = array<i32>} : memref<1x4x256xf32, #tpu.memory_space<vmem>>, vector<1x4x256xf32>,
    %c1_i32_22 = arith.constant 1 : i32
    return
  }
  func.func @transform_0(%arg0: i32) -> (i32, i32, i32) {
    %c0_i32 = arith.constant 0 : i32
    %c0_i32_0 = arith.constant 0 : i32
    %c0_i32_1 = arith.constant 0 : i32
    return %arg0, %c0_i32, %c0_i32_0 : i32, i32, i32
  }
  func.func @transform_1(%arg0: i32) -> (i32, i32) {
    %c0_i32 = arith.constant 0 : i32
    %c0_i32_0 = arith.constant 0 : i32
    %c0_i32_1 = arith.constant 0 : i32
    return %c0_i32, %c0_i32_0 : i32, i32
  }
  func.func @transform_2(%arg0: i32) -> (i32, i32) {
    %c0_i32 = arith.constant 0 : i32
    %c0_i32_0 = arith.constant 0 : i32
    %c0_i32_1 = arith.constant 0 : i32
    return %c0_i32, %c0_i32_0 : i32, i32
  }
  func.func @transform_3(%arg0: i32) -> (i32, i32, i32) {
    %c0_i32 = arith.constant 0 : i32
    %c0_i32_0 = arith.constant 0 : i32
    %c0_i32_1 = arith.constant 0 : i32
    %c0_i32_2 = arith.constant 0 : i32
    return %c0_i32, %c0_i32_0, %c0_i32_1 : i32, i32, i32
  }
  func.func @transform_4(%arg0: i32) -> (i32, i32, i32) {
    %c0_i32 = arith.constant 0 : i32
    %c0_i32_0 = arith.constant 0 : i32
    %c0_i32_1 = arith.constant 0 : i32
    return %arg0, %c0_i32, %c0_i32_0 : i32, i32, i32
  }
}

</mosaic_0001>

<llo_original>
// kernel: tpu_custom_call.1
$region0: #{tpu_custom_call.1}
  #allocation0 [shape = 'u32[]', space=smem, size = 0x4, offset = 0x4, fixed_abs, tag = 'smem constant byte address 0x4 - core index']
  #allocation1 [shape = 'u32[72,128]{1,0:T(1,128)}', space=vmem, size = 0x9000, scoped, tag = 'internal scratch']
  %s0 = inlined_call_operand.hbm [shape: f32[2,4,256], index: 0, kind: input, shape index: {}]
  %s1 = inlined_call_operand.vmem [shape: f32[8,72], index: 1, kind: input, shape index: {}]
  %s2 = inlined_call_operand.hbm [shape: f32[4,256], index: 2, kind: input, shape index: {}]
  %s3 = inlined_call_operand.vmem [shape: f32[2,4,1], index: 3, kind: input, shape index: {}]
  %s4 = inlined_call_operand.hbm [shape: f32[2,4,256], index: 4, kind: output, shape index: {}]
  %s5 = sld [smem:[#allocation0]]
  $region57: #{tpu_custom_call.1} parent=0
    _
  %s7 = ssub.s32 1, %s5
  %s8 = scalar_select 0, %s7, %s5
  $region1: #{tpu_custom_call.1} parent=0
    #allocation2 [shape = 'u8[8192]{0}', space=vmem, size = 0x2000, scoped, tag = 'input window, operand 0']
    #allocation3 [shape = 's32[2]{0}', space=sflag, size = 0x8, scoped, tag = 'scoped memory for tpu_custom_call.1']
    #allocation4 [shape = 's32[2]{0}', space=sflag, size = 0x8, scoped, tag = 'scoped memory for tpu_custom_call.1']
    #allocation5 [shape = 'u8[4096]{0}', space=vmem, size = 0x1000, scoped, tag = 'input window, operand 2, single buffered']
    #allocation6 [shape = 's32[1]{0}', space=sflag, size = 0x4, scoped, tag = 'scoped memory for tpu_custom_call.1']
    #allocation7 [shape = 'u8[8192]{0}', space=vmem, size = 0x2000, scoped, tag = 'output window, operand 0']
    %9 = vsyncpa [#allocation3], 0
    %s10 = scalar_lea.sflag [#allocation3], 1
    %11 = vsyncpa %s10, 0
    %12 = vsyncpa [#allocation6], 0
    %13 = vsyncpa [#allocation4], 0
    %s14 = scalar_lea.sflag [#allocation4], 1
    %15 = vsyncpa %s14, 0
    loop: start=0, step=1, limit=4
    $region2: #{tpu_custom_call.1} parent=1 // loop_pre_header
      _
    $region3: #{tpu_custom_call.1} parent=1 // loop_header
      %s17 = sphi 0, %s21
      %p18 = scmp.ge.s32.totalorder %s17, 4
      %s27 = sphi 0, %s29
      %s30 = sphi 0, %s27
      %s31 = sphi 0, %s30
      %s47 = sphi 0, %s31
      %s51 = sphi 0, %s51
      %s53 = sphi 0, %s51
      %s54 = sphi 0, %s53
      %s68 = sphi 0, %s54
      %s72 = sphi 0, %s72
      %s74 = sphi 0, %s72
      %s75 = sphi 0, %s74
      %s89 = sphi 0, %s75
      %s93 = sphi 0, %s93
      %s95 = sphi 0, %s93
      %s96 = sphi 0, %s95
      %s110 = sphi 0, %s96
      %s116 = sphi 0, %s118
      %s119 = sphi 0, %s116
      %s120 = sphi 0, %s119
      %s136 = sphi 0, %s120
    $region4: #{tpu_custom_call.1} parent=1 // loop_header_branch
      %20 = sbr.rel (%p18) target = $region8
    $region5: #{tpu_custom_call.1} parent=1 // loop_body
      %s22 = ssub.s32 %s17, 1
      %s23 = ssub.s32 %s17, 2
      %s24 = sadd.s32 %s17, 1
      %s25 = ssub.s32 %s17, %s24
      %p26 = scmp.eq.s32.totalorder %s25, 0
      %s28 = sadd.s32 %s27, 1
      %s29 = scalar_select %p26, %s27, %s28
      %p32 = pneg %p26
      %p33 = scmp.eq.s32.totalorder %s17, 1
      %p34 = por %p32, %p33
      %p35 = scmp.ne.s32.totalorder %s27, %s30
      %p36 = scmp.eq.s32.totalorder %s17, 0
      %p37 = por %p35, %p36
      %p38 = scmp.ne.s32.totalorder %s27, %s30
      %p39 = scmp.eq.s32.totalorder %s22, 1
      %p40 = por %p38, %p39
      %p41 = scmp.ne.s32.totalorder %s30, %s31
      %p42 = scmp.eq.s32.totalorder %s22, 0
      %p43 = por %p41, %p42
      %p44 = scmp.ne.s32.totalorder %s30, %s31
      %p45 = scmp.eq.s32.totalorder %s23, 1
      %p46 = por %p44, %p45
      %p48 = scmp.ne.s32.totalorder %s31, %s47
      %p49 = scmp.eq.s32.totalorder %s23, 0
      %p50 = por %p48, %p49
      %s52 = sadd.s32 %s51, 1
      %p55 = scmp.eq.s32.totalorder %s17, 1
      %p56 = scmp.ne.s32.totalorder %s51, %s53
      %p57 = scmp.eq.s32.totalorder %s17, 0
      %p58 = por %p56, %p57
      %p59 = scmp.ne.s32.totalorder %s51, %s53
      %p60 = scmp.eq.s32.totalorder %s22, 1
      %p61 = por %p59, %p60
      %p62 = scmp.ne.s32.totalorder %s53, %s54
      %p63 = scmp.eq.s32.totalorder %s22, 0
      %p64 = por %p62, %p63
      %p65 = scmp.ne.s32.totalorder %s53, %s54
      %p66 = scmp.eq.s32.totalorder %s23, 1
      %p67 = por %p65, %p66
      %p69 = scmp.ne.s32.totalorder %s54, %s68
      %p70 = scmp.eq.s32.totalorder %s23, 0
      %p71 = por %p69, %p70
      %s73 = sadd.s32 %s72, 1
      %p76 = scmp.eq.s32.totalorder %s17, 1
      %p77 = scmp.ne.s32.totalorder %s72, %s74
      %p78 = scmp.eq.s32.totalorder %s17, 0
      %p79 = por %p77, %p78
      %p80 = scmp.ne.s32.totalorder %s72, %s74
      %p81 = scmp.eq.s32.totalorder %s22, 1
      %p82 = por %p80, %p81
      %p83 = scmp.ne.s32.totalorder %s74, %s75
      %p84 = scmp.eq.s32.totalorder %s22, 0
      %p85 = por %p83, %p84
      %p86 = scmp.ne.s32.totalorder %s74, %s75
      %p87 = scmp.eq.s32.totalorder %s23, 1
      %p88 = por %p86, %p87
      %p90 = scmp.ne.s32.totalorder %s75, %s89
      %p91 = scmp.eq.s32.totalorder %s23, 0
      %p92 = por %p90, %p91
      %s94 = sadd.s32 %s93, 1
      %p97 = scmp.eq.s32.totalorder %s17, 1
      %p98 = scmp.ne.s32.totalorder %s93, %s95
      %p99 = scmp.eq.s32.totalorder %s17, 0
      %p100 = por %p98, %p99
      %p101 = scmp.ne.s32.totalorder %s93, %s95
      %p102 = scmp.eq.s32.totalorder %s22, 1
      %p103 = por %p101, %p102
      %p104 = scmp.ne.s32.totalorder %s95, %s96
      %p105 = scmp.eq.s32.totalorder %s22, 0
      %p106 = por %p104, %p105
      %p107 = scmp.ne.s32.totalorder %s95, %s96
      %p108 = scmp.eq.s32.totalorder %s23, 1
      %p109 = por %p107, %p108
      %p111 = scmp.ne.s32.totalorder %s96, %s110
      %p112 = scmp.eq.s32.totalorder %s23, 0
      %p113 = por %p111, %p112
      %s114 = ssub.s32 %s17, %s24
      %p115 = scmp.eq.s32.totalorder %s114, 0
      %s117 = sadd.s32 %s116, 1
      %s118 = scalar_select %p115, %s116, %s117
      %p121 = pneg %p115
      %p122 = scmp.eq.s32.totalorder %s17, 1
      %p123 = por %p121, %p122
      %p124 = scmp.ne.s32.totalorder %s116, %s119
      %p125 = scmp.eq.s32.totalorder %s17, 0
      %p126 = por %p124, %p125
      %p127 = scmp.ne.s32.totalorder %s116, %s119
      %p128 = scmp.eq.s32.totalorder %s22, 1
      %p129 = por %p127, %p128
      %p130 = scmp.ne.s32.totalorder %s119, %s120
      %p131 = scmp.eq.s32.totalorder %s22, 0
      %p132 = por %p130, %p131
      %p133 = scmp.ne.s32.totalorder %s119, %s120
      %p134 = scmp.eq.s32.totalorder %s23, 1
      %p135 = por %p133, %p134
      %p137 = scmp.ne.s32.totalorder %s120, %s136
      %p138 = scmp.eq.s32.totalorder %s23, 0
      %p139 = por %p137, %p138
      %p140 = scmp.le.s32.totalorder 1, %s17
      %p141 = scmp.lt.s32.totalorder %s17, 3
      %p142 = pnand %p140, %p141
      %p143 = pneg %p142
      // Predicated region
      $region9: #{tpu_custom_call.1} parent=5 // pred_check
        _
      $region10: #{tpu_custom_call.1} parent=5 // pred_check_branch
        %145 = sbr.rel (%p142) target = $region12
      $region11: #{tpu_custom_call.1} parent=5 // pred_region
        %s146 = ssub.s32 %s17, 1
        // Predicated region
        $region13: #{tpu_custom_call.1} parent=11 // pred_check
          %p147 = pneg %p64
        $region14: #{tpu_custom_call.1} parent=11 // pred_check_branch
          %149 = sbr.rel (%p147) target = $region16
        $region15: #{tpu_custom_call.1} parent=11 // pred_region
          _
        $region16: #{tpu_custom_call.1} parent=11 // pred_fallthru
          _
        // Predicated region
        $region17: #{tpu_custom_call.1} parent=11 // pred_check
          %p150 = pneg %p85
        $region18: #{tpu_custom_call.1} parent=11 // pred_check_branch
          %152 = sbr.rel (%p150) target = $region20
        $region19: #{tpu_custom_call.1} parent=11 // pred_region
          %154 = vsyncadd [#allocation6], 0
          %s156 = sshll.u32 %s2, 4
          %s157 = int_to_ptr.hbm [resolvable:$true] %s156
          %s158 = sshll.u32 [#allocation5], 4
          %s159 = int_to_ptr.vmem [resolvable:$true] %s158
          %161 = dma.hbm_to_vmem [thread:$0]  %s157, 128, %s159, [#allocation6]
        $region20: #{tpu_custom_call.1} parent=11 // pred_fallthru
          _
        // Predicated region
        $region21: #{tpu_custom_call.1} parent=11 // pred_check
          %p162 = pneg %p106
        $region22: #{tpu_custom_call.1} parent=11 // pred_check_branch
          %164 = sbr.rel (%p162) target = $region24
        $region23: #{tpu_custom_call.1} parent=11 // pred_region
          _
        $region24: #{tpu_custom_call.1} parent=11 // pred_fallthru
          _
      $region12: #{tpu_custom_call.1} parent=5 // pred_fallthru
        _
      %p165 = scmp.lt.s32.totalorder %s17, 2
      // Predicated region
      $region25: #{tpu_custom_call.1} parent=5 // pred_check
        %p166 = pneg %p165
      $region26: #{tpu_custom_call.1} parent=5 // pred_check_branch
        %168 = sbr.rel (%p166) target = $region28
      $region27: #{tpu_custom_call.1} parent=5 // pred_region
        // Predicated region
        $region29: #{tpu_custom_call.1} parent=27 // pred_check
          %p169 = pneg %p37
        $region30: #{tpu_custom_call.1} parent=27 // pred_check_branch
          %171 = sbr.rel (%p169) target = $region32
        $region31: #{tpu_custom_call.1} parent=27 // pred_region
          %s172 = sand.u32 %s27, 1
          %s173 = scalar_lea.sflag [#allocation3], %s172
          %s174 = sand.u32 %s27, 1
          %s175 = smul.addr %s174, 8
          %s176 = scalar_lea.vmem [#allocation2], %s175
          %178 = vsyncadd %s173, 0
          %s179 = smul.addr %s17, 2
          %s180 = smul.addr %s179, 4
          %s181 = scalar_lea.hbm %s0, %s180
          %s183 = sshll.u32 %s181, 4
          %s184 = int_to_ptr.hbm [resolvable:$true] %s183
          %s185 = sshll.u32 %s176, 4
          %s186 = int_to_ptr.vmem [resolvable:$true] %s185
          %188 = dma.hbm_to_vmem [thread:$0]  %s184, 128, %s186, %s173
        $region32: #{tpu_custom_call.1} parent=27 // pred_fallthru
          _
      $region28: #{tpu_custom_call.1} parent=5 // pred_fallthru
        _
      %p189 = scmp.le.s32.totalorder 1, %s17
      %p190 = scmp.lt.s32.totalorder %s17, 3
      %p191 = pnand %p189, %p190
      %p192 = pneg %p191
      // Predicated region
      $region33: #{tpu_custom_call.1} parent=5 // pred_check
        _
      $region34: #{tpu_custom_call.1} parent=5 // pred_check_branch
        %194 = sbr.rel (%p191) target = $region36
      $region35: #{tpu_custom_call.1} parent=5 // pred_region
        %s195 = ssub.s32 %s17, 1
        %s196 = sand.u32 %s30, 1
        %s197 = scalar_lea.sflag [#allocation3], %s196
        %s198 = sand.u32 %s30, 1
        %s199 = smul.addr %s198, 8
        %s200 = scalar_lea.vmem [#allocation2], %s199
        // Predicated region
        $region37: #{tpu_custom_call.1} parent=35 // pred_check
          %p201 = pneg %p43
        $region38: #{tpu_custom_call.1} parent=35 // pred_check_branch
          %203 = sbr.rel (%p201) target = $region40
        $region39: #{tpu_custom_call.1} parent=35 // pred_region
          %205 = dma.done %s197, 128
        $region40: #{tpu_custom_call.1} parent=35 // pred_fallthru
          _
        // Predicated region
        $region41: #{tpu_custom_call.1} parent=35 // pred_check
          %p206 = pneg %p85
        $region42: #{tpu_custom_call.1} parent=35 // pred_check_branch
          %208 = sbr.rel (%p206) target = $region44
        $region43: #{tpu_custom_call.1} parent=35 // pred_region
          %210 = dma.done [#allocation6], 128
        $region44: #{tpu_custom_call.1} parent=35 // pred_fallthru
          _
        %s211 = sand.u32 %s30, 1
        %s212 = scalar_lea.sflag [#allocation3], %s211
        %s213 = sand.u32 %s30, 1
        %s214 = smul.addr %s213, 8
        %s215 = scalar_lea.vmem [#allocation2], %s214
        %p216 = pneg %p43
        %p217 = pneg %p40
        %p218 = pneg %p64
        %p219 = pneg %p61
        %p220 = pneg %p85
        %p221 = pneg %p82
        %p222 = pneg %p106
        %p223 = pneg %p103
        %p224 = pneg %p132
        %p225 = pneg %p129
        %s226 = sand.u32 %s119, 1
        %s227 = scalar_lea.sflag [#allocation4], %s226
        %s228 = sand.u32 %s119, 1
        %s229 = smul.addr %s228, 8
        %s230 = scalar_lea.vmem [#allocation7], %s229
        %v231 = vld [vmem:[%s1] sm:$0xff]
        %v232 = vld [vmem:[%s3] sm:$0xf]
        %s233 = scalar_lea.vmem %s3, 4
        %v234 = vld [vmem:[%s233] sm:$0xf]
        %v235 = vld [vmem:[#allocation5] ss:$4 sm:$0x3]
        %s236 = scalar_lea.vmem [#allocation5], 1
        %v237 = vld [vmem:[%s236] ss:$4 sm:$0x3]
        %s238 = scalar_lea.vmem [#allocation5], 2
        %v239 = vld [vmem:[%s238] ss:$4 sm:$0x3]
        %s240 = scalar_lea.vmem [#allocation5], 3
        %v241 = vld [vmem:[%s240] ss:$4 sm:$0x3]
        %v242 = vmul.f32 %v235, %v239
        %v243 = vmul.f32 %v235, %v241
        %v244 = vmul.f32 %v237, %v239
        %v245 = vmul.f32 %v237, %v241
        %v246 = vld [vmem:[%s200] sm:$0xff]
        %248 = vst [vmem:[#allocation1] ss:$2 sm:$0xff] %v246
        %v249 = vld.sshfl [vmem:[#allocation1] sm:$0xff pattern:$0x75316420]
        %v250 = vld.sshfl [vmem:[#allocation1 + $0x8] sm:$0xff pattern:$0x75316420]
        %vm253 = vcmask 1043456
        %v254 = vsel %vm253, %v249, 0.0
        %v255 = vsel %vm253, %v250, 0.0
        %256 = vrot.lane.b32.xlu0 %v254, 17
        %v257 = vpop.permute.xlu0 %256
        %258 = vrot.lane.b32.xlu0 %v255, 17
        %v259 = vpop.permute.xlu0 %258
        %v260 = vlaneseq
        %v261 = vand.u32 %v260, 127
        %vm262 = vcmp.lt.s32.totalorder %v261, 17
        %v263 = vsel %vm262, %v257, %v259
        %v264 = vsel %vm262, %v259, %v257
        %v266 = vperm.slane %v242, 0
        %v267 = vperm.slane %v242, 1
        %v270 = vmul.f32 %v264, %v266
        %v271 = vmul.f32 %v263, %v267
        %272 = vrot.lane.b32.xlu0 %v254, 16
        %v273 = vpop.permute.xlu0 %272
        %274 = vrot.lane.b32.xlu0 %v255, 16
        %v275 = vpop.permute.xlu0 %274
        %vm276 = vcmp.lt.s32.totalorder %v261, 16
        %v277 = vsel %vm276, %v273, %v275
        %v278 = vsel %vm276, %v275, %v273
        %v280 = vperm.slane %v235, 0
        %v281 = vperm.slane %v235, 1
        %v284 = vmul.f32 %v278, %v280
        %v285 = vmul.f32 %v277, %v281
        %286 = vrot.lane.b32.xlu0 %v254, 15
        %v287 = vpop.permute.xlu0 %286
        %288 = vrot.lane.b32.xlu0 %v255, 15
        %v289 = vpop.permute.xlu0 %288
        %vm290 = vcmp.lt.s32.totalorder %v261, 15
        %v291 = vsel %vm290, %v287, %v289
        %v292 = vsel %vm290, %v289, %v287
        %v294 = vperm.slane %v243, 0
        %v295 = vperm.slane %v243, 1
        %v298 = vmul.f32 %v292, %v294
        %v299 = vmul.f32 %v291, %v295
        %300 = vrot.lane.b32.xlu0 %v254, 1
        %v301 = vpop.permute.xlu0 %300
        %302 = vrot.lane.b32.xlu0 %v255, 1
        %v303 = vpop.permute.xlu0 %302
        %vm304 = vcmp.lt.s32.totalorder %v261, 1
        %v305 = vsel %vm304, %v301, %v303
        %v306 = vsel %vm304, %v303, %v301
        %v308 = vperm.slane %v239, 0
        %v309 = vperm.slane %v239, 1
        %v312 = vmul.f32 %v306, %v308
        %v313 = vmul.f32 %v305, %v309
        %314 = vrot.lane.b32.xlu0 %v254, 127
        %v315 = vpop.permute.xlu0 %314
        %316 = vrot.lane.b32.xlu0 %v255, 127
        %v317 = vpop.permute.xlu0 %316
        %vm318 = vcmp.lt.s32.totalorder %v261, 127
        %v319 = vsel %vm318, %v315, %v317
        %v320 = vsel %vm318, %v317, %v315
        %v322 = vperm.slane %v241, 0
        %v323 = vperm.slane %v241, 1
        %v326 = vmul.f32 %v319, %v322
        %v327 = vmul.f32 %v320, %v323
        %328 = vrot.lane.b32.xlu0 %v254, 113
        %v329 = vpop.permute.xlu0 %328
        %330 = vrot.lane.b32.xlu0 %v255, 113
        %v331 = vpop.permute.xlu0 %330
        %vm332 = vcmp.lt.s32.totalorder %v261, 113
        %v333 = vsel %vm332, %v329, %v331
        %v334 = vsel %vm332, %v331, %v329
        %v336 = vperm.slane %v244, 0
        %v337 = vperm.slane %v244, 1
        %v340 = vmul.f32 %v333, %v336
        %v341 = vmul.f32 %v334, %v337
        %342 = vrot.lane.b32.xlu0 %v254, 112
        %v343 = vpop.permute.xlu0 %342
        %344 = vrot.lane.b32.xlu0 %v255, 112
        %v345 = vpop.permute.xlu0 %344
        %vm346 = vcmp.lt.s32.totalorder %v261, 112
        %v347 = vsel %vm346, %v343, %v345
        %v348 = vsel %vm346, %v345, %v343
        %v350 = vperm.slane %v237, 0
        %v351 = vperm.slane %v237, 1
        %v354 = vmul.f32 %v347, %v350
        %v355 = vmul.f32 %v348, %v351
        %356 = vrot.lane.b32.xlu0 %v254, 111
        %v357 = vpop.permute.xlu0 %356
        %358 = vrot.lane.b32.xlu0 %v255, 111
        %v359 = vpop.permute.xlu0 %358
        %vm360 = vcmp.lt.s32.totalorder %v261, 111
        %v361 = vsel %vm360, %v357, %v359
        %v362 = vsel %vm360, %v359, %v357
        %v364 = vperm.slane %v245, 0
        %v365 = vperm.slane %v245, 1
        %v368 = vmul.f32 %v361, %v364
        %v369 = vmul.f32 %v362, %v365
        %vm370 = vcmask 588800
        %v372 = vsel %vm370, %v231, 0
        %374 = vmatpush.msra.mxu0 0.0
        %375 = vmatpush.msra.mxu0 0.0
        %376 = vmatpush.msra.mxu0 0.0
        %377 = vmatpush.msra.mxu0 0.0
        %378 = vmatpush.msra.mxu0 0.0
        %379 = vmatpush.msra.mxu0 0.0
        %380 = vmatpush.msra.mxu0 0.0
        %381 = vmatpush.msra.mxu0 %v368
        %382 = vmatpush.msra.mxu0 %v354
        %383 = vmatpush.msra.mxu0 %v340
        %384 = vmatpush.msra.mxu0 %v326
        %385 = vmatpush.msra.mxu0 %v254
        %386 = vmatpush.msra.mxu0 %v312
        %387 = vmatpush.msra.mxu0 %v298
        %388 = vmatpush.msra.mxu0 %v284
        %389 = vmatpush.msra.mxu0 %v270
        %390 = vmatmul.f32.gmra.mxu0 %v372
        %v391 = vpop.f32.mrf.mxu0
        %v392 = vadd.f32 0.0, %v391
        %393 = vdwg.mxu0
        %394 = vmatpush.msra.mxu0 0.0
        %395 = vmatpush.msra.mxu0 0.0
        %396 = vmatpush.msra.mxu0 0.0
        %397 = vmatpush.msra.mxu0 0.0
        %398 = vmatpush.msra.mxu0 0.0
        %399 = vmatpush.msra.mxu0 0.0
        %400 = vmatpush.msra.mxu0 0.0
        %401 = vmatpush.msra.mxu0 %v369
        %402 = vmatpush.msra.mxu0 %v355
        %403 = vmatpush.msra.mxu0 %v341
        %404 = vmatpush.msra.mxu0 %v327
        %405 = vmatpush.msra.mxu0 %v255
        %406 = vmatpush.msra.mxu0 %v313
        %407 = vmatpush.msra.mxu0 %v299
        %408 = vmatpush.msra.mxu0 %v285
        %409 = vmatpush.msra.mxu0 %v271
        %410 = vmatmul.f32.gmra.mxu0 %v372
        %v411 = vpop.f32.mrf.mxu0
        %v412 = vadd.f32 0.0, %v411
        %413 = vdwg.mxu0
        %415 = vset.pattern.permute.xlu0 0
        %416 = vperm.xlu0 %415, %v232
        %v417 = vpop.permute.xlu0 %416
        %v419 = vmul.f32 %v392, %v417
        %v420 = vmul.f32 %v412, %v417
        %422 = vset.pattern.permute.xlu0 0
        %423 = vperm.xlu0 %422, %v234
        %v424 = vpop.permute.xlu0 %423
        %v426 = vadd.f32 %v419, %v424
        %v427 = vadd.f32 %v420, %v424
        %v428 = vmul.f32 %v426, 0.5
        %v429 = vmul.f32 %v427, 0.5
        %v430 = vtanh.pop %v428
        %v431 = vtanh.pop %v429
        %v432 = vadd.f32 %v430, 1.0
        %v433 = vadd.f32 %v431, 1.0
        %v434 = vmul.f32 %v432, 0.5
        %v435 = vmul.f32 %v433, 0.5
        %v438 = vrot.slane %v435, 4
        %v439 = vsel %vm253, %v434, %v438
        %441 = vst [vmem:[%s230] sm:$0xff] %v439
        %s442 = sand.u32 %s119, 1
        %s443 = scalar_lea.sflag [#allocation4], %s442
        %s444 = sand.u32 %s119, 1
        %s445 = smul.addr %s444, 8
        %s446 = scalar_lea.vmem [#allocation7], %s445
        // Predicated region
        $region45: #{tpu_custom_call.1} parent=35 // pred_check
          %p447 = pneg %p129
        $region46: #{tpu_custom_call.1} parent=35 // pred_check_branch
          %449 = sbr.rel (%p447) target = $region48
        $region47: #{tpu_custom_call.1} parent=35 // pred_region
          %451 = vsyncadd %s443, 0
          %s452 = smul.addr %s22, 2
          %s453 = smul.addr %s452, 4
          %s454 = scalar_lea.hbm %s4, %s453
          %s456 = sshll.u32 %s446, 4
          %s457 = int_to_ptr.vmem [resolvable:$true] %s456
          %s458 = sshll.u32 %s454, 4
          %s459 = int_to_ptr.hbm [resolvable:$true] %s458
          %461 = dma.vmem_to_hbm [thread:$0]  %s457, 128, %s459, %s443
        $region48: #{tpu_custom_call.1} parent=35 // pred_fallthru
          _
      $region36: #{tpu_custom_call.1} parent=5 // pred_fallthru
        _
      %p462 = scmp.le.s32.totalorder 2, %s17
      // Predicated region
      $region49: #{tpu_custom_call.1} parent=5 // pred_check
        %p463 = pneg %p462
      $region50: #{tpu_custom_call.1} parent=5 // pred_check_branch
        %465 = sbr.rel (%p463) target = $region52
      $region51: #{tpu_custom_call.1} parent=5 // pred_region
        %s466 = ssub.s32 %s17, 2
        // Predicated region
        $region53: #{tpu_custom_call.1} parent=51 // pred_check
          %p467 = pneg %p135
        $region54: #{tpu_custom_call.1} parent=51 // pred_check_branch
          %469 = sbr.rel (%p467) target = $region56
        $region55: #{tpu_custom_call.1} parent=51 // pred_region
          %s470 = sand.u32 %s120, 1
          %s471 = scalar_lea.sflag [#allocation4], %s470
          %s472 = sand.u32 %s120, 1
          %s473 = smul.addr %s472, 8
          %s474 = scalar_lea.vmem [#allocation7], %s473
          %476 = dma.done %s471, 128
        $region56: #{tpu_custom_call.1} parent=51 // pred_fallthru
          _
      $region52: #{tpu_custom_call.1} parent=5 // pred_fallthru
        _
    $region6: #{tpu_custom_call.1} parent=1 // loop_footer
      %s21 = sadd.s32 1, %s17
    $region7: #{tpu_custom_call.1} parent=1 // loop_footer_branch
      %16 = sbr.rel target = $region3
    $region8: #{tpu_custom_call.1} parent=1 // loop_exit
      _
    %477 = vsyncpa [#allocation3], 1
    %s478 = scalar_lea.sflag [#allocation3], 1
    %479 = vsyncpa %s478, 1
    %480 = vsyncpa [#allocation6], 1
    %481 = vsyncpa [#allocation4], 1
    %s482 = scalar_lea.sflag [#allocation4], 1
    %483 = vsyncpa %s482, 1

</llo_original>
